<compile_context>
chip_gen: v6e
topology: v6e:2x2x1
jax: 0.10.0
libtpu: 0.0.40
codegen_flags: <defaults>
</compile_context>

<pallas_src>
import numpy as np
import jax
import jax.numpy as jnp
from jax.experimental import pallas as pl
from jax.experimental.pallas import tpu as pltpu


def _round_up(x, m):
    return ((x + m - 1) // m) * m


def _make_kernel(tn, n_blk):
    """Kernel closure over the static n sub-tile size (tn) and split width (n_blk)."""

    def ible_kernel(emb_ref, hemb_ref, rels_ref, relid_ref, tails_ref, out_ref):
        j = pl.program_id(0)                 # n-split (parallel, megacore on v7x)
        k = pl.program_id(1)                 # m-tile  (edge reduction, arbitrary)

        # Output block is revisited across the whole k axis -> it is the
        # accumulator; zero it once at the start of the reduction.
        @pl.when(k == 0)
        def _():
            out_ref[...] = jnp.zeros_like(out_ref)

        # edge[b, e] = <emb[b], all_emb[head[e]]>   (cosine=True, activation='none')
        # bf16 operands, f32 MXU accumulation.  Computed ONCE per m-tile.
        edge = jax.lax.dot_general(
            emb_ref[...], hemb_ref[...],
            dimension_numbers=(((1,), (1,)), ((), ())),
            preferred_element_type=jnp.float32)                    # (bs, tm) f32

        # Relation mask built on the fly from int32 ids
        # (exactly r_mask[relation_ids].T of the reference module).
        mask = rels_ref[...] == relid_ref[...]                     # (bs, tm) bool
        edge = jnp.where(mask, edge, 0.0)

        # Scatter-add onto tail entities (aggregator2, 'add'):
        # one-hot tail incidence built transposed (tn, tm) so the lane-major
        # (1, tm) tail ids need no reorientation; contracted on the MXU in f32.
        tails = tails_ref[...]                                     # (1, tm) int32
        iota_col = jax.lax.broadcasted_iota(jnp.int32, (tn, 1), 0)  # hoisted
        base = j * n_blk
        for jj in range(n_blk // tn):                              # static unroll
            tloc = tails - (base + jj * tn)                        # (1, tm) shift
            a2t_t = (iota_col == tloc).astype(jnp.float32)         # (tn, tm) 0/1
            out_ref[:, jj * tn:(jj + 1) * tn] += jax.lax.dot_general(
                edge, a2t_t,
                dimension_numbers=(((1,), (1,)), ((), ())),
                preferred_element_type=jnp.float32)                # (bs, tn)

    return ible_kernel


def ible_forward(emb, all_emb, heads, relations, tails, relation_ids, nentity,
                 *, tn=512, tm=512, n_splits=2):
    """IBLE.forward for mode='tail-batch', relation_aware=None, cosine=True,
    activation='none', pooling='add', use_mlp=False.  Returns (bs, n) f32."""
    bs, d = emb.shape
    m = int(heads.shape[0])
    n = int(nentity)

    # ----- tile sizing -----
    bs_pad = _round_up(bs, 8)                               # sublane alignment
    tm = max(256, _round_up(min(tm, _round_up(m, 256)), 256))   # full MXU depth
    m_pad = _round_up(m, tm)
    n_blk_min = -(-n // n_splits)
    tn = max(128, min(_round_up(tn, 128), _round_up(n_blk_min, 128)))
    n_pad = _round_up(n, n_splits * tn)
    n_blk = n_pad // n_splits                               # columns per split

    # ----- padding protocol -----
    # Padded edges carry relation id -1 (never matches a real query relation),
    # so the in-kernel mask makes them contribute exactly zero; head/tail id 0
    # is then harmless.  Padded batch rows (relation -1, zero emb) are sliced off.
    heads_p = jnp.pad(heads.astype(jnp.int32), (0, m_pad - m))
    rels_p = jnp.pad(relations.astype(jnp.int32), (0, m_pad - m), constant_values=-1)
    tails_p = jnp.pad(tails.astype(jnp.int32), (0, m_pad - m))
    emb_p = jnp.pad(emb, ((0, bs_pad - bs), (0, 0)))
    rid_p = jnp.pad(relation_ids.astype(jnp.int32), (0, bs_pad - bs),
                    constant_values=-1)

    # Algebraic reassociation of aggregator1 (gather, aggr='add'):
    #   edge_score = all_emb[heads] @ emb.T
    # One cheap XLA row gather replaces the dense (m, n) incidence matmul.
    head_emb = jnp.take(all_emb, heads_p, axis=0).astype(jnp.bfloat16)  # (m_pad, d)
    emb_bf = emb_p.astype(jnp.bfloat16)                                 # (bs_pad, d)
    rel_row = rels_p.reshape(1, m_pad)       # edge relation ids, lane-major
    tail_row = tails_p.reshape(1, m_pad)     # edge tail ids, lane-major
    rid_col = rid_p.reshape(bs_pad, 1)       # query relation ids

    grid = (n_splits, m_pad // tm)
    kernel = _make_kernel(tn=tn, n_blk=n_blk)

    # ----- VMEM budget: output block is the accumulator (double-buffered f32),
    # plus bf16 emb / head_emb tiles and the small id rows. -----
    footprint = (2 * bs_pad * n_blk * 4          # resident output / accumulator
                 + 2 * bs_pad * d * 2            # emb block (bf16)
                 + 2 * tm * d * 2                # head_emb tile (bf16)
                 + 2 * 2 * (8 * tm * 4)          # (1, tm) int rows, sublane-padded
                 + 2 * bs_pad * 128 * 4)         # (bs, 1) ids, lane-padded
    try:
        vmem_cap = pltpu.get_tpu_info().vmem_capacity_bytes
    except Exception:
        vmem_cap = 64 * 1024 * 1024              # conservative (v7x-sized) fallback
    vmem_limit = int(min(max(4 * footprint, 32 * 1024 * 1024), (3 * vmem_cap) // 4))

    out = pl.pallas_call(
        kernel,
        out_shape=jax.ShapeDtypeStruct((bs_pad, n_pad), jnp.float32),
        grid_spec=pltpu.PrefetchScalarGridSpec(
            num_scalar_prefetch=0,
            grid=grid,
            in_specs=[
                pl.BlockSpec((bs_pad, d), lambda j, k: (0, 0)),   # query embeddings
                pl.BlockSpec((tm, d), lambda j, k: (k, 0)),       # head embeddings
                pl.BlockSpec((1, tm), lambda j, k: (0, k)),       # edge relations
                pl.BlockSpec((bs_pad, 1), lambda j, k: (0, 0)),   # query relations
                pl.BlockSpec((1, tm), lambda j, k: (0, k)),       # edge tails
            ],
            out_specs=pl.BlockSpec((bs_pad, n_blk), lambda j, k: (0, j)),
        ),
        compiler_params=pltpu.CompilerParams(
            dimension_semantics=("parallel", "arbitrary"),
            vmem_limit_bytes=vmem_limit,
        ),
    )(emb_bf, head_emb, rel_row, rid_col, tail_row)

    return out[:bs, :n]


if __name__ == "__main__":
    # Small, tile-aligned deterministic setup (no checkpoint / file IO).
    nentity = 256          # n
    nrelation = 8
    n_edges = 512          # m
    bs = 8
    entity_dim = 64
    hidden_dim = 2 * entity_dim        # config.double_entity_embedding=True

    key = jax.random.PRNGKey(0)
    kh, kr, kt, ke, ka, kq = jax.random.split(key, 6)
    heads = jax.random.randint(kh, (n_edges,), 0, nentity, dtype=jnp.int32)
    relations = jax.random.randint(kr, (n_edges,), 0, nrelation, dtype=jnp.int32)
    tails = jax.random.randint(kt, (n_edges,), 0, nentity, dtype=jnp.int32)
    # Integer-valued embeddings -> bf16 inputs and f32 accumulation are exact,
    # so the kernel can be checked against the reference with tight tolerance.
    emb = jax.random.randint(ke, (bs, hidden_dim), -3, 4).astype(jnp.float32)
    all_emb = jax.random.randint(ka, (nentity, hidden_dim), -3, 4).astype(jnp.float32)
    relation_ids = jax.random.randint(kq, (bs,), 0, nrelation, dtype=jnp.int32)

    out = jax.block_until_ready(
        ible_forward(emb, all_emb, heads, relations, tails, relation_ids, nentity))

    # Pure-JAX reference of the same forward path (sparse formulation),
    # mirroring the kernel's bf16-input / f32-accumulate quantization.
    emb_q = emb.astype(jnp.bfloat16).astype(jnp.float32)
    hemb_q = all_emb.astype(jnp.bfloat16).astype(jnp.float32)[heads]     # (m, d)
    edge_ref = emb_q @ hemb_q.T                                          # (bs, m)
    edge_ref = jnp.where(relations[None, :] == relation_ids[:, None], edge_ref, 0.0)
    ref = jnp.zeros((bs, nentity), jnp.float32).at[:, tails].add(edge_ref)

    assert out.shape == (bs, nentity)
    np.testing.assert_allclose(np.asarray(out), np.asarray(ref),
                               rtol=1e-5, atol=1e-5)
    print("KERNEL_OK")
</pallas_src>

<mosaic_0001>
module attributes {stable_mosaic.version = 11 : i64} {
  func.func @ible_kernel(%arg0: i32, %arg1: i32, %arg2: memref<8x128xbf16, #tpu.memory_space<vmem>>, %arg3: memref<512x128xbf16, #tpu.memory_space<vmem>>, %arg4: memref<1x512xi32, #tpu.memory_space<vmem>>, %arg5: memref<8x1xi32, #tpu.memory_space<vmem>>, %arg6: memref<1x512xi32, #tpu.memory_space<vmem>>, %arg7: memref<8x128xf32, #tpu.memory_space<vmem>>) attributes {dimension_semantics = [#tpu.dimension_semantics<parallel>, #tpu.dimension_semantics<arbitrary>], iteration_bounds = array<i64: 2, 1>, scalar_prefetch = 0 : i64, scratch_operands = 0 : i64, tpu.core_type = #tpu.core_type<tc>, window_params = [{pipeline_mode = #tpu.pipeline_mode<synchronous>, transform_indices = @transform_0, window_bounds = array<i64: 8, 128>}, {transform_indices = @transform_1, window_bounds = array<i64: 512, 128>}, {transform_indices = @transform_2, window_bounds = array<i64: 1, 512>}, {pipeline_mode = #tpu.pipeline_mode<synchronous>, transform_indices = @transform_3, window_bounds = array<i64: 8, 1>}, {transform_indices = @transform_4, window_bounds = array<i64: 1, 512>}, {transform_indices = @transform_5, window_bounds = array<i64: 8, 128>}]} {
    %c0_i32 = arith.constant 0 : i32
    %0 = arith.cmpi eq, %arg1, %c0_i32 : i32
    %1 = arith.extui %0 : i1 to i32
    %c0_i32_0 = arith.constant 0 : i32
    %2 = arith.cmpi ne, %1, %c0_i32_0 : i32
    scf.if %2 {
      %cst_17 = arith.constant 0.000000e+00 : f32
      %28 = vector.broadcast %cst_17 : f32 to vector<8x128xf32>
      %c0_18 = arith.constant 0 : index
      %c0_19 = arith.constant 0 : index
      %29 = vector.load %arg7[%c0_18, %c0_19] : memref<8x128xf32, #tpu.memory_space<vmem>>, vector<8x128xf32>
      tpu.vector_store %arg7[%c0_18, %c0_19], %28 {strides = array<i32>} : memref<8x128xf32, #tpu.memory_space<vmem>>, vector<8x128xf32>,
    } else {
    }
    %c0 = arith.constant 0 : index
    %c0_1 = arith.constant 0 : index
    %3 = vector.load %arg2[%c0, %c0_1] : memref<8x128xbf16, #tpu.memory_space<vmem>>, vector<8x128xbf16>
    %c0_2 = arith.constant 0 : index
    %c0_3 = arith.constant 0 : index
    %4 = vector.load %arg3[%c0_2, %c0_3] : memref<512x128xbf16, #tpu.memory_space<vmem>>, vector<512x128xbf16>
    %cst = arith.constant dense<0.000000e+00> : vector<8x512xf32>
    %5 = tpu.matmul %3, %4, %cst {dimension_numbers = #tpu.dot_dimension_numbers<[1], [1], [0], [0], [0, 0, 1, 0], [], []>} : vector<8x128xbf16>, vector<512x128xbf16>, vector<8x512xf32> -> vector<8x512xf32>
    %c0_4 = arith.constant 0 : index
    %c0_5 = arith.constant 0 : index
    %6 = vector.load %arg4[%c0_4, %c0_5] : memref<1x512xi32, #tpu.memory_space<vmem>>, vector<1x512xi32>
    %c0_6 = arith.constant 0 : index
    %c0_7 = arith.constant 0 : index
    %7 = vector.load %arg5[%c0_6, %c0_7] : memref<8x1xi32, #tpu.memory_space<vmem>>, vector<8x1xi32>
    %8 = vector.broadcast %6 : vector<1x512xi32> to vector<8x512xi32>
    %9 = vector.broadcast %7 : vector<8x1xi32> to vector<8x512xi32>
    %10 = arith.cmpi eq, %8, %9 : vector<8x512xi32>
    %cst_8 = arith.constant 0.000000e+00 : f32
    %11 = vector.broadcast %cst_8 : f32 to vector<8x512xf32>
    %12 = arith.select %10, %5, %11 : vector<8x512xi1>, vector<8x512xf32>
    %c0_9 = arith.constant 0 : index
    %c0_10 = arith.constant 0 : index
    %13 = vector.load %arg6[%c0_9, %c0_10] : memref<1x512xi32, #tpu.memory_space<vmem>>, vector<1x512xi32>
    %14 = tpu.iota {dimensions = array<i32: 0>} : vector<128x1xi32>
    %c128_i32 = arith.constant 128 : i32
    %15 = arith.muli %arg0, %c128_i32 : i32
    %c0_i32_11 = arith.constant 0 : i32
    %16 = arith.addi %15, %c0_i32_11 : i32
    %17 = vector.broadcast %16 : i32 to vector<1x512xi32>
    %18 = arith.subi %13, %17 : vector<1x512xi32>
    %19 = vector.broadcast %14 : vector<128x1xi32> to vector<128x512xi32>
    %20 = vector.broadcast %18 : vector<1x512xi32> to vector<128x512xi32>
    %21 = arith.cmpi eq, %19, %20 : vector<128x512xi32>
    %22 = arith.extui %21 : vector<128x512xi1> to vector<128x512xi32>
    %23 = arith.sitofp %22 : vector<128x512xi32> to vector<128x512xf32>
    %c0_12 = arith.constant 0 : index
    %c0_13 = arith.constant 0 : index
    %24 = vector.load %arg7[%c0_12, %c0_13] : memref<8x128xf32, #tpu.memory_space<vmem>>, vector<8x128xf32>
    %cst_14 = arith.constant dense<0.000000e+00> : vector<8x128xf32>
    %25 = tpu.matmul %12, %23, %cst_14 {dimension_numbers = #tpu.dot_dimension_numbers<[1], [1], [0], [0], [0, 0, 1, 0], [], []>} : vector<8x512xf32>, vector<128x512xf32>, vector<8x128xf32> -> vector<8x128xf32>
    %26 = arith.addf %24, %25 : vector<8x128xf32>
    %c0_15 = arith.constant 0 : index
    %c0_16 = arith.constant 0 : index
    %27 = vector.load %arg7[%c0_15, %c0_16] : memref<8x128xf32, #tpu.memory_space<vmem>>, vector<8x128xf32>
    tpu.vector_store %arg7[%c0_15, %c0_16], %26 {strides = array<i32>} : memref<8x128xf32, #tpu.memory_space<vmem>>, vector<8x128xf32>,
    return
  }
  func.func @transform_0(%arg0: i32, %arg1: i32) -> (i32, i32) {
    %c0_i32 = arith.constant 0 : i32
    %c0_i32_0 = arith.constant 0 : i32
    %c0_i32_1 = arith.constant 0 : i32
    return %c0_i32, %c0_i32_0 : i32, i32
  }
  func.func @transform_1(%arg0: i32, %arg1: i32) -> (i32, i32) {
    %c0_i32 = arith.constant 0 : i32
    %c0_i32_0 = arith.constant 0 : i32
    return %arg1, %c0_i32 : i32, i32
  }
  func.func @transform_2(%arg0: i32, %arg1: i32) -> (i32, i32) {
    %c0_i32 = arith.constant 0 : i32
    %c0_i32_0 = arith.constant 0 : i32
    return %c0_i32, %arg1 : i32, i32
  }
  func.func @transform_3(%arg0: i32, %arg1: i32) -> (i32, i32) {
    %c0_i32 = arith.constant 0 : i32
    %c0_i32_0 = arith.constant 0 : i32
    %c0_i32_1 = arith.constant 0 : i32
    return %c0_i32, %c0_i32_0 : i32, i32
  }
  func.func @transform_4(%arg0: i32, %arg1: i32) -> (i32, i32) {
    %c0_i32 = arith.constant 0 : i32
    %c0_i32_0 = arith.constant 0 : i32
    return %c0_i32, %arg1 : i32, i32
  }
  func.func @transform_5(%arg0: i32, %arg1: i32) -> (i32, i32) {
    %c0_i32 = arith.constant 0 : i32
    %c0_i32_0 = arith.constant 0 : i32
    return %c0_i32, %arg0 : i32, i32
  }
}

</mosaic_0001>

<llo_original>
// kernel: tpu_custom_call.1
$region0: #{tpu_custom_call.1}
  #allocation0 [shape = 'u32[]', space=smem, size = 0x4, offset = 0x4, fixed_abs, tag = 'smem constant byte address 0x4 - core index']
  #allocation1 [shape = 'u32[144,128]{1,0:T(1,128)}', space=vmem, size = 0x12000, scoped, tag = 'internal scratch']
  %s0 = inlined_call_operand.vmem [shape: bf16[8,128], index: 0, kind: input, shape index: {}]
  %s1 = inlined_call_operand.hbm [shape: bf16[512,128], index: 1, kind: input, shape index: {}]
  %s2 = inlined_call_operand.vmem [shape: s32[1,512], index: 2, kind: input, shape index: {}]
  %s3 = inlined_call_operand.vmem [shape: s32[8,1], index: 3, kind: input, shape index: {}]
  %s4 = inlined_call_operand.vmem [shape: s32[1,512], index: 4, kind: input, shape index: {}]
  %s5 = inlined_call_operand.hbm [shape: f32[8,256], index: 5, kind: output, shape index: {}]
  %s6 = sld [smem:[#allocation0]]
  $region61: #{tpu_custom_call.1} parent=0
    _
  %s8 = ssub.s32 1, %s6
  %s9 = scalar_select 0, %s8, %s6
  $region1: #{tpu_custom_call.1} parent=0
    #allocation2 [shape = 'u8[131072]{0}', space=vmem, size = 0x20000, scoped, tag = 'input window, operand 1, single buffered']
    #allocation3 [shape = 's32[2]{0}', space=sflag, size = 0x8, scoped, tag = 'scoped memory for tpu_custom_call.1']
    #allocation4 [shape = 's32[2]{0}', space=sflag, size = 0x8, scoped, tag = 'scoped memory for tpu_custom_call.1']
    #allocation5 [shape = 'u8[8192]{0}', space=vmem, size = 0x2000, scoped, tag = 'output window, operand 0']
    %10 = vsyncpa [#allocation3], 0
    %11 = vsyncpa [#allocation4], 0
    %s12 = scalar_lea.sflag [#allocation4], 1
    %13 = vsyncpa %s12, 0
    loop: start=0, step=1, limit=4
    $region2: #{tpu_custom_call.1} parent=1 // loop_pre_header
      _
    $region3: #{tpu_custom_call.1} parent=1 // loop_header
      %s15 = sphi 0, %s19
      %p16 = scmp.ge.s32.totalorder %s15, 4
      %s22 = sphi 0, %s34
      %s23 = sphi 0, %s30
      %s24 = sphi 0, %s22
      %s25 = sphi 0, %s23
      %s26 = sphi 0, %s24
      %s27 = sphi 0, %s25
      %s35 = sphi 0, %s35
      %s37 = sphi 0, %s35
      %s38 = sphi 0, %s37
      %s52 = sphi 0, %s38
      %s58 = sphi 0, %s60
      %s61 = sphi 0, %s58
      %s62 = sphi 0, %s61
      %s78 = sphi 0, %s62
      %s84 = sphi 0, %s86
      %s87 = sphi 0, %s84
      %s88 = sphi 0, %s87
      %s104 = sphi 0, %s88
      %s108 = sphi 0, %s108
      %s110 = sphi 0, %s108
      %s111 = sphi 0, %s110
      %s125 = sphi 0, %s111
      %s131 = sphi 0, %s133
      %s134 = sphi 0, %s131
      %s135 = sphi 0, %s134
      %s151 = sphi 0, %s135
      %s157 = sphi 0, %s159
      %s160 = sphi 0, %s157
      %s161 = sphi 0, %s160
      %s177 = sphi 0, %s161
    $region4: #{tpu_custom_call.1} parent=1 // loop_header_branch
      %18 = sbr.rel (%p16) target = $region8
    $region5: #{tpu_custom_call.1} parent=1 // loop_body
      %s20 = ssub.s32 %s15, 1
      %s21 = ssub.s32 %s15, 2
      %s28 = sadd.s32 1, %s23
      %p29 = scmp.ge.s32.totalorder %s28, 1
      %s30 = scalar_select %p29, 0, %s28
      %s31 = sadd.s32 1, %s22
      %s32 = scalar_select %p29, %s31, %s22
      %p33 = scmp.ge.s32.totalorder %s32, 2
      %s34 = scalar_select %p33, 0, %s32
      %s36 = sadd.s32 %s35, 1
      %p39 = scmp.eq.s32.totalorder %s15, 1
      %p40 = scmp.ne.s32.totalorder %s35, %s37
      %p41 = scmp.eq.s32.totalorder %s15, 0
      %p42 = por %p40, %p41
      %p43 = scmp.ne.s32.totalorder %s35, %s37
      %p44 = scmp.eq.s32.totalorder %s20, 1
      %p45 = por %p43, %p44
      %p46 = scmp.ne.s32.totalorder %s37, %s38
      %p47 = scmp.eq.s32.totalorder %s20, 0
      %p48 = por %p46, %p47
      %p49 = scmp.ne.s32.totalorder %s37, %s38
      %p50 = scmp.eq.s32.totalorder %s21, 1
      %p51 = por %p49, %p50
      %p53 = scmp.ne.s32.totalorder %s38, %s52
      %p54 = scmp.eq.s32.totalorder %s21, 0
      %p55 = por %p53, %p54
      %s56 = ssub.s32 %s23, %s30
      %p57 = scmp.eq.s32.totalorder %s56, 0
      %s59 = sadd.s32 %s58, 1
      %s60 = scalar_select %p57, %s58, %s59
      %p63 = pneg %p57
      %p64 = scmp.eq.s32.totalorder %s15, 1
      %p65 = por %p63, %p64
      %p66 = scmp.ne.s32.totalorder %s58, %s61
      %p67 = scmp.eq.s32.totalorder %s15, 0
      %p68 = por %p66, %p67
      %p69 = scmp.ne.s32.totalorder %s58, %s61
      %p70 = scmp.eq.s32.totalorder %s20, 1
      %p71 = por %p69, %p70
      %p72 = scmp.ne.s32.totalorder %s61, %s62
      %p73 = scmp.eq.s32.totalorder %s20, 0
      %p74 = por %p72, %p73
      %p75 = scmp.ne.s32.totalorder %s61, %s62
      %p76 = scmp.eq.s32.totalorder %s21, 1
      %p77 = por %p75, %p76
      %p79 = scmp.ne.s32.totalorder %s62, %s78
      %p80 = scmp.eq.s32.totalorder %s21, 0
      %p81 = por %p79, %p80
      %s82 = ssub.s32 %s23, %s30
      %p83 = scmp.eq.s32.totalorder %s82, 0
      %s85 = sadd.s32 %s84, 1
      %s86 = scalar_select %p83, %s84, %s85
      %p89 = pneg %p83
      %p90 = scmp.eq.s32.totalorder %s15, 1
      %p91 = por %p89, %p90
      %p92 = scmp.ne.s32.totalorder %s84, %s87
      %p93 = scmp.eq.s32.totalorder %s15, 0
      %p94 = por %p92, %p93
      %p95 = scmp.ne.s32.totalorder %s84, %s87
      %p96 = scmp.eq.s32.totalorder %s20, 1
      %p97 = por %p95, %p96
      %p98 = scmp.ne.s32.totalorder %s87, %s88
      %p99 = scmp.eq.s32.totalorder %s20, 0
      %p100 = por %p98, %p99
      %p101 = scmp.ne.s32.totalorder %s87, %s88
      %p102 = scmp.eq.s32.totalorder %s21, 1
      %p103 = por %p101, %p102
      %p105 = scmp.ne.s32.totalorder %s88, %s104
      %p106 = scmp.eq.s32.totalorder %s21, 0
      %p107 = por %p105, %p106
      %s109 = sadd.s32 %s108, 1
      %p112 = scmp.eq.s32.totalorder %s15, 1
      %p113 = scmp.ne.s32.totalorder %s108, %s110
      %p114 = scmp.eq.s32.totalorder %s15, 0
      %p115 = por %p113, %p114
      %p116 = scmp.ne.s32.totalorder %s108, %s110
      %p117 = scmp.eq.s32.totalorder %s20, 1
      %p118 = por %p116, %p117
      %p119 = scmp.ne.s32.totalorder %s110, %s111
      %p120 = scmp.eq.s32.totalorder %s20, 0
      %p121 = por %p119, %p120
      %p122 = scmp.ne.s32.totalorder %s110, %s111
      %p123 = scmp.eq.s32.totalorder %s21, 1
      %p124 = por %p122, %p123
      %p126 = scmp.ne.s32.totalorder %s111, %s125
      %p127 = scmp.eq.s32.totalorder %s21, 0
      %p128 = por %p126, %p127
      %s129 = ssub.s32 %s23, %s30
      %p130 = scmp.eq.s32.totalorder %s129, 0
      %s132 = sadd.s32 %s131, 1
      %s133 = scalar_select %p130, %s131, %s132
      %p136 = pneg %p130
      %p137 = scmp.eq.s32.totalorder %s15, 1
      %p138 = por %p136, %p137
      %p139 = scmp.ne.s32.totalorder %s131, %s134
      %p140 = scmp.eq.s32.totalorder %s15, 0
      %p141 = por %p139, %p140
      %p142 = scmp.ne.s32.totalorder %s131, %s134
      %p143 = scmp.eq.s32.totalorder %s20, 1
      %p144 = por %p142, %p143
      %p145 = scmp.ne.s32.totalorder %s134, %s135
      %p146 = scmp.eq.s32.totalorder %s20, 0
      %p147 = por %p145, %p146
      %p148 = scmp.ne.s32.totalorder %s134, %s135
      %p149 = scmp.eq.s32.totalorder %s21, 1
      %p150 = por %p148, %p149
      %p152 = scmp.ne.s32.totalorder %s135, %s151
      %p153 = scmp.eq.s32.totalorder %s21, 0
      %p154 = por %p152, %p153
      %s155 = ssub.s32 %s22, %s34
      %p156 = scmp.eq.s32.totalorder %s155, 0
      %s158 = sadd.s32 %s157, 1
      %s159 = scalar_select %p156, %s157, %s158
      %p162 = pneg %p156
      %p163 = scmp.eq.s32.totalorder %s15, 1
      %p164 = por %p162, %p163
      %p165 = scmp.ne.s32.totalorder %s157, %s160
      %p166 = scmp.eq.s32.totalorder %s15, 0
      %p167 = por %p165, %p166
      %p168 = scmp.ne.s32.totalorder %s157, %s160
      %p169 = scmp.eq.s32.totalorder %s20, 1
      %p170 = por %p168, %p169
      %p171 = scmp.ne.s32.totalorder %s160, %s161
      %p172 = scmp.eq.s32.totalorder %s20, 0
      %p173 = por %p171, %p172
      %p174 = scmp.ne.s32.totalorder %s160, %s161
      %p175 = scmp.eq.s32.totalorder %s21, 1
      %p176 = por %p174, %p175
      %p178 = scmp.ne.s32.totalorder %s161, %s177
      %p179 = scmp.eq.s32.totalorder %s21, 0
      %p180 = por %p178, %p179
      %p181 = scmp.le.s32.totalorder 1, %s15
      %p182 = scmp.lt.s32.totalorder %s15, 3
      %p183 = pnand %p181, %p182
      %p184 = pneg %p183
      // Predicated region
      $region9: #{tpu_custom_call.1} parent=5 // pred_check
        _
      $region10: #{tpu_custom_call.1} parent=5 // pred_check_branch
        %186 = sbr.rel (%p183) target = $region12
      $region11: #{tpu_custom_call.1} parent=5 // pred_region
        %s187 = ssub.s32 %s15, 1
        // Predicated region
        $region13: #{tpu_custom_call.1} parent=11 // pred_check
          %p188 = pneg %p48
        $region14: #{tpu_custom_call.1} parent=11 // pred_check_branch
          %190 = sbr.rel (%p188) target = $region16
        $region15: #{tpu_custom_call.1} parent=11 // pred_region
          _
        $region16: #{tpu_custom_call.1} parent=11 // pred_fallthru
          _
        // Predicated region
        $region17: #{tpu_custom_call.1} parent=11 // pred_check
          %p191 = pneg %p74
        $region18: #{tpu_custom_call.1} parent=11 // pred_check_branch
          %193 = sbr.rel (%p191) target = $region20
        $region19: #{tpu_custom_call.1} parent=11 // pred_region
          %s194 = smul.u32 64, %s25
          %s196 = ssub.s32 4096, 4096
          %197 = vsyncadd [#allocation3], %s196
          %s198 = smul.addr %s194, 64
          %s199 = scalar_lea.hbm %s1, %s198
          %s200 = sshll.u32 [#allocation2], 4
          %s201 = int_to_ptr.vmem [resolvable:$true] %s200
          %206 = dma.hbm_to_vmem [thread:$0]  %s199, 4096, %s201, [#allocation3], 64, 64, 4
        $region20: #{tpu_custom_call.1} parent=11 // pred_fallthru
          _
        // Predicated region
        $region21: #{tpu_custom_call.1} parent=11 // pred_check
          %p207 = pneg %p100
        $region22: #{tpu_custom_call.1} parent=11 // pred_check_branch
          %209 = sbr.rel (%p207) target = $region24
        $region23: #{tpu_custom_call.1} parent=11 // pred_region
          %s210 = smul.u32 4, %s25
          %p211 = scmp.lt.s32.totalorder %s210, 3
          %s212 = scalar_select %p211, %s210, 3
          %s213 = scalar_lea.vmem %s2, %s212
          %s214 = smul.u32 4, %s25
        $region24: #{tpu_custom_call.1} parent=11 // pred_fallthru
          _
        // Predicated region
        $region25: #{tpu_custom_call.1} parent=11 // pred_check
          %p215 = pneg %p121
        $region26: #{tpu_custom_call.1} parent=11 // pred_check_branch
          %217 = sbr.rel (%p215) target = $region28
        $region27: #{tpu_custom_call.1} parent=11 // pred_region
          _
        $region28: #{tpu_custom_call.1} parent=11 // pred_fallthru
          _
        // Predicated region
        $region29: #{tpu_custom_call.1} parent=11 // pred_check
          %p218 = pneg %p147
        $region30: #{tpu_custom_call.1} parent=11 // pred_check_branch
          %220 = sbr.rel (%p218) target = $region32
        $region31: #{tpu_custom_call.1} parent=11 // pred_region
          %s221 = smul.u32 4, %s25
          %p222 = scmp.lt.s32.totalorder %s221, 3
          %s223 = scalar_select %p222, %s221, 3
          %s224 = scalar_lea.vmem %s4, %s223
          %s225 = smul.u32 4, %s25
        $region32: #{tpu_custom_call.1} parent=11 // pred_fallthru
          _
      $region12: #{tpu_custom_call.1} parent=5 // pred_fallthru
        _
      %p226 = scmp.lt.s32.totalorder %s15, 2
      // Predicated region
      $region33: #{tpu_custom_call.1} parent=5 // pred_check
        %p227 = pneg %p226
      $region34: #{tpu_custom_call.1} parent=5 // pred_check_branch
        %229 = sbr.rel (%p227) target = $region36
      $region35: #{tpu_custom_call.1} parent=5 // pred_region
        _
      $region36: #{tpu_custom_call.1} parent=5 // pred_fallthru
        _
      %p230 = scmp.le.s32.totalorder 1, %s15
      %p231 = scmp.lt.s32.totalorder %s15, 3
      %p232 = pnand %p230, %p231
      %p233 = pneg %p232
      // Predicated region
      $region37: #{tpu_custom_call.1} parent=5 // pred_check
        _
      $region38: #{tpu_custom_call.1} parent=5 // pred_check_branch
        %235 = sbr.rel (%p232) target = $region40
      $region39: #{tpu_custom_call.1} parent=5 // pred_region
        %s236 = ssub.s32 %s15, 1
        // Predicated region
        $region41: #{tpu_custom_call.1} parent=39 // pred_check
          %p237 = pneg %p74
        $region42: #{tpu_custom_call.1} parent=39 // pred_check_branch
          %239 = sbr.rel (%p237) target = $region44
        $region43: #{tpu_custom_call.1} parent=39 // pred_region
          %240 = dma.done [#allocation3], 4096
        $region44: #{tpu_custom_call.1} parent=39 // pred_fallthru
          _
        %p241 = pneg %p48
        %p242 = pneg %p45
        %p243 = pneg %p74
        %p244 = pneg %p71
        %s245 = smul.u32 4, %s25
        %p246 = scmp.lt.s32.totalorder %s245, 3
        %s247 = scalar_select %p246, %s245, 3
        %s248 = scalar_lea.vmem %s2, %s247
        %p249 = pneg %p100
        %p250 = pneg %p97
        %p251 = pneg %p121
        %p252 = pneg %p118
        %s253 = smul.u32 4, %s25
        %p254 = scmp.lt.s32.totalorder %s253, 3
        %s255 = scalar_select %p254, %s253, 3
        %s256 = scalar_lea.vmem %s4, %s255
        %p257 = pneg %p147
        %p258 = pneg %p144
        %p259 = pneg %p173
        %p260 = pneg %p170
        %s261 = sand.u32 %s160, 1
        %s262 = scalar_lea.sflag [#allocation4], %s261
        %s263 = sand.u32 %s160, 1
        %s264 = smul.addr %s263, 8
        %s265 = scalar_lea.vmem [#allocation5], %s264
        %s266 = smul.u32 64, %s25
        %s267 = smul.u32 4, %s25
        %p268 = scmp.lt.s32.totalorder %s267, 3
        %s269 = scalar_select %p268, %s267, 3
        %s270 = scalar_lea.vmem %s2, %s269
        %s271 = smul.u32 4, %s25
        %s272 = smul.u32 4, %s25
        %p273 = scmp.lt.s32.totalorder %s272, 3
        %s274 = scalar_select %p273, %s272, 3
        %s275 = scalar_lea.vmem %s4, %s274
        %s276 = smul.u32 4, %s25
        %p278 = scmp.eq.s32.totalorder %s25, 0
        // Predicated region
        $region45: #{tpu_custom_call.1} parent=39 // pred_check
          %p279 = pneg %p278
        $region46: #{tpu_custom_call.1} parent=39 // pred_check_branch
          %281 = sbr.rel (%p279) target = $region48
        $region47: #{tpu_custom_call.1} parent=39 // pred_region
          %282 = vst [vmem:[%s265] sm:$0xff] 0.0
        $region48: #{tpu_custom_call.1} parent=39 // pred_fallthru
          _
        %v283 = vld [vmem:[%s0] sm:$0xf]
        %v284 = vld [vmem:[#allocation2] sm:$0xf]
        %v285 = vld [vmem:[#allocation2 + $0x4] sm:$0xf]
        %v286 = vld [vmem:[#allocation2 + $0x8] sm:$0xf]
        %v287 = vld [vmem:[#allocation2 + $0xc] sm:$0xf]
        %v288 = vld [vmem:[#allocation2 + $0x10] sm:$0xf]
        %v289 = vld [vmem:[#allocation2 + $0x14] sm:$0xf]
        %v290 = vld [vmem:[#allocation2 + $0x18] sm:$0xf]
        %v291 = vld [vmem:[#allocation2 + $0x1c] sm:$0xf]
        %v292 = vld [vmem:[#allocation2 + $0x20] sm:$0xf]
        %v293 = vld [vmem:[#allocation2 + $0x24] sm:$0xf]
        %v294 = vld [vmem:[#allocation2 + $0x28] sm:$0xf]
        %v295 = vld [vmem:[#allocation2 + $0x2c] sm:$0xf]
        %v296 = vld [vmem:[#allocation2 + $0x30] sm:$0xf]
        %v297 = vld [vmem:[#allocation2 + $0x34] sm:$0xf]
        %v298 = vld [vmem:[#allocation2 + $0x38] sm:$0xf]
        %v299 = vld [vmem:[#allocation2 + $0x3c] sm:$0xf]
        %v300 = vld [vmem:[#allocation2 + $0x40] sm:$0xf]
        %v301 = vld [vmem:[#allocation2 + $0x44] sm:$0xf]
        %v302 = vld [vmem:[#allocation2 + $0x48] sm:$0xf]
        %v303 = vld [vmem:[#allocation2 + $0x4c] sm:$0xf]
        %v304 = vld [vmem:[#allocation2 + $0x50] sm:$0xf]
        %v305 = vld [vmem:[#allocation2 + $0x54] sm:$0xf]
        %v306 = vld [vmem:[#allocation2 + $0x58] sm:$0xf]
        %v307 = vld [vmem:[#allocation2 + $0x5c] sm:$0xf]
        %v308 = vld [vmem:[#allocation2 + $0x60] sm:$0xf]
        %v309 = vld [vmem:[#allocation2 + $0x64] sm:$0xf]
        %v310 = vld [vmem:[#allocation2 + $0x68] sm:$0xf]
        %v311 = vld [vmem:[#allocation2 + $0x6c] sm:$0xf]
        %v312 = vld [vmem:[#allocation2 + $0x70] sm:$0xf]
        %v313 = vld [vmem:[#allocation2 + $0x74] sm:$0xf]
        %v314 = vld [vmem:[#allocation2 + $0x78] sm:$0xf]
        %v315 = vld [vmem:[#allocation2 + $0x7c] sm:$0xf]
        %v316 = vld [vmem:[#allocation2 + $0x80] sm:$0xf]
        %v317 = vld [vmem:[#allocation2 + $0x84] sm:$0xf]
        %v318 = vld [vmem:[#allocation2 + $0x88] sm:$0xf]
        %v319 = vld [vmem:[#allocation2 + $0x8c] sm:$0xf]
        %v320 = vld [vmem:[#allocation2 + $0x90] sm:$0xf]
        %v321 = vld [vmem:[#allocation2 + $0x94] sm:$0xf]
        %v322 = vld [vmem:[#allocation2 + $0x98] sm:$0xf]
        %v323 = vld [vmem:[#allocation2 + $0x9c] sm:$0xf]
        %v324 = vld [vmem:[#allocation2 + $0xa0] sm:$0xf]
        %v325 = vld [vmem:[#allocation2 + $0xa4] sm:$0xf]
        %v326 = vld [vmem:[#allocation2 + $0xa8] sm:$0xf]
        %v327 = vld [vmem:[#allocation2 + $0xac] sm:$0xf]
        %v328 = vld [vmem:[#allocation2 + $0xb0] sm:$0xf]
        %v329 = vld [vmem:[#allocation2 + $0xb4] sm:$0xf]
        %v330 = vld [vmem:[#allocation2 + $0xb8] sm:$0xf]
        %v331 = vld [vmem:[#allocation2 + $0xbc] sm:$0xf]
        %v332 = vld [vmem:[#allocation2 + $0xc0] sm:$0xf]
        %v333 = vld [vmem:[#allocation2 + $0xc4] sm:$0xf]
        %v334 = vld [vmem:[#allocation2 + $0xc8] sm:$0xf]
        %v335 = vld [vmem:[#allocation2 + $0xcc] sm:$0xf]
        %v336 = vld [vmem:[#allocation2 + $0xd0] sm:$0xf]
        %v337 = vld [vmem:[#allocation2 + $0xd4] sm:$0xf]
        %v338 = vld [vmem:[#allocation2 + $0xd8] sm:$0xf]
        %v339 = vld [vmem:[#allocation2 + $0xdc] sm:$0xf]
        %v340 = vld [vmem:[#allocation2 + $0xe0] sm:$0xf]
        %v341 = vld [vmem:[#allocation2 + $0xe4] sm:$0xf]
        %v342 = vld [vmem:[#allocation2 + $0xe8] sm:$0xf]
        %v343 = vld [vmem:[#allocation2 + $0xec] sm:$0xf]
        %v344 = vld [vmem:[#allocation2 + $0xf0] sm:$0xf]
        %v345 = vld [vmem:[#allocation2 + $0xf4] sm:$0xf]
        %v346 = vld [vmem:[#allocation2 + $0xf8] sm:$0xf]
        %v347 = vld [vmem:[#allocation2 + $0xfc] sm:$0xf]
        %v412 = vunpack.c.l.b16 %v284
        %v413 = vunpack.c.l.b16 %v285
        %v414 = vunpack.c.l.b16 %v286
        %v415 = vunpack.c.l.b16 %v287
        %v416 = vunpack.c.l.b16 %v288
        %v417 = vunpack.c.l.b16 %v289
        %v418 = vunpack.c.l.b16 %v290
        %v419 = vunpack.c.l.b16 %v291
        %v420 = vunpack.c.l.b16 %v292
        %v421 = vunpack.c.l.b16 %v293
        %v422 = vunpack.c.l.b16 %v294
        %v423 = vunpack.c.l.b16 %v295
        %v424 = vunpack.c.l.b16 %v296
        %v425 = vunpack.c.l.b16 %v297
        %v426 = vunpack.c.l.b16 %v298
        %v427 = vunpack.c.l.b16 %v299
        %v428 = vunpack.c.l.b16 %v300
        %v429 = vunpack.c.l.b16 %v301
        %v430 = vunpack.c.l.b16 %v302
        %v431 = vunpack.c.l.b16 %v303
        %v432 = vunpack.c.l.b16 %v304
        %v433 = vunpack.c.l.b16 %v305
        %v434 = vunpack.c.l.b16 %v306
        %v435 = vunpack.c.l.b16 %v307
        %v436 = vunpack.c.l.b16 %v308
        %v437 = vunpack.c.l.b16 %v309
        %v438 = vunpack.c.l.b16 %v310
        %v439 = vunpack.c.l.b16 %v311
        %v440 = vunpack.c.l.b16 %v312
        %v441 = vunpack.c.l.b16 %v313
        %v442 = vunpack.c.l.b16 %v314
        %v443 = vunpack.c.l.b16 %v315
        %v444 = vunpack.c.l.b16 %v316
        %v445 = vunpack.c.l.b16 %v317
        %v446 = vunpack.c.l.b16 %v318
        %v447 = vunpack.c.l.b16 %v319
        %v448 = vunpack.c.l.b16 %v320
        %v449 = vunpack.c.l.b16 %v321
        %v450 = vunpack.c.l.b16 %v322
        %v451 = vunpack.c.l.b16 %v323
        %v452 = vunpack.c.l.b16 %v324
        %v453 = vunpack.c.l.b16 %v325
        %v454 = vunpack.c.l.b16 %v326
        %v455 = vunpack.c.l.b16 %v327
        %v456 = vunpack.c.l.b16 %v328
        %v457 = vunpack.c.l.b16 %v329
        %v458 = vunpack.c.l.b16 %v330
        %v459 = vunpack.c.l.b16 %v331
        %v460 = vunpack.c.l.b16 %v332
        %v461 = vunpack.c.l.b16 %v333
        %v462 = vunpack.c.l.b16 %v334
        %v463 = vunpack.c.l.b16 %v335
        %v464 = vunpack.c.l.b16 %v336
        %v465 = vunpack.c.l.b16 %v337
        %v466 = vunpack.c.l.b16 %v338
        %v467 = vunpack.c.l.b16 %v339
        %v468 = vunpack.c.l.b16 %v340
        %v469 = vunpack.c.l.b16 %v341
        %v470 = vunpack.c.l.b16 %v342
        %v471 = vunpack.c.l.b16 %v343
        %v472 = vunpack.c.l.b16 %v344
        %v473 = vunpack.c.l.b16 %v345
        %v474 = vunpack.c.l.b16 %v346
        %v475 = vunpack.c.l.b16 %v347
        %v476 = vpack.c.b16 %v413, %v412
        %v477 = vpack.c.b16 %v415, %v414
        %v478 = vpack.c.b16 %v417, %v416
        %v479 = vpack.c.b16 %v419, %v418
        %v480 = vpack.c.b16 %v421, %v420
        %v481 = vpack.c.b16 %v423, %v422
        %v482 = vpack.c.b16 %v425, %v424
        %v483 = vpack.c.b16 %v427, %v426
        %v484 = vpack.c.b16 %v429, %v428
        %v485 = vpack.c.b16 %v431, %v430
        %v486 = vpack.c.b16 %v433, %v432
        %v487 = vpack.c.b16 %v435, %v434
        %v488 = vpack.c.b16 %v437, %v436
        %v489 = vpack.c.b16 %v439, %v438
        %v490 = vpack.c.b16 %v441, %v440
        %v491 = vpack.c.b16 %v443, %v442
        %v492 = vpack.c.b16 %v445, %v444
        %v493 = vpack.c.b16 %v447, %v446
        %v494 = vpack.c.b16 %v449, %v448
        %v495 = vpack.c.b16 %v451, %v450
        %v496 = vpack.c.b16 %v453, %v452
        %v497 = vpack.c.b16 %v455, %v454
        %v498 = vpack.c.b16 %v457, %v456
        %v499 = vpack.c.b16 %v459, %v458
        %v500 = vpack.c.b16 %v461, %v460
        %v501 = vpack.c.b16 %v463, %v462
        %v502 = vpack.c.b16 %v465, %v464
        %v503 = vpack.c.b16 %v467, %v466
        %v504 = vpack.c.b16 %v469, %v468
        %v505 = vpack.c.b16 %v471, %v470
        %v506 = vpack.c.b16 %v473, %v472
        %v507 = vpack.c.b16 %v475, %v474
        %540 = vmatprep.subr.bf16.mxu0 0
        %541 = vmatpush1.bf16.xpose.msra.mxu0 %v483
        %542 = vmatprep.subr.bf16.mxu0 0
        %543 = vmatpush1.bf16.xpose.msra.mxu0 %v482
        %544 = vmatprep.subr.bf16.mxu0 0
        %545 = vmatpush1.bf16.xpose.msra.mxu0 %v481
        %546 = vmatprep.subr.bf16.mxu0 0
        %547 = vmatpush1.bf16.xpose.msra.mxu0 %v480
        %548 = vmatprep.subr.bf16.mxu0 0
        %549 = vmatpush1.bf16.xpose.msra.mxu0 %v479
        %550 = vmatprep.subr.bf16.mxu0 0
        %551 = vmatpush1.bf16.xpose.msra.mxu0 %v478
        %552 = vmatprep.subr.bf16.mxu0 0
        %553 = vmatpush1.bf16.xpose.msra.mxu0 %v477
        %554 = vmatprep.subr.bf16.mxu0 0
        %555 = vmatpush1.bf16.xpose.msra.mxu0 %v476
        %556 = vmatprep.subr.bf16.mxu0 0
        %557 = vmatpush2.bf16.xpose.msra.mxu0 %v491
        %558 = vmatprep.subr.bf16.mxu0 0
        %559 = vmatpush2.bf16.xpose.msra.mxu0 %v490
        %560 = vmatprep.subr.bf16.mxu0 0
        %561 = vmatpush2.bf16.xpose.msra.mxu0 %v489
        %562 = vmatprep.subr.bf16.mxu0 0
        %563 = vmatpush2.bf16.xpose.msra.mxu0 %v488
        %564 = vmatprep.subr.bf16.mxu0 0
        %565 = vmatpush2.bf16.xpose.msra.mxu0 %v487
        %566 = vmatprep.subr.bf16.mxu0 0
        %567 = vmatpush2.bf16.xpose.msra.mxu0 %v486
        %568 = vmatprep.subr.bf16.mxu0 0
        %569 = vmatpush2.bf16.xpose.msra.mxu0 %v485
        %570 = vmatprep.subr.bf16.mxu0 0
        %571 = vmatpush2.bf16.xpose.msra.mxu0 %v484
        %572 = vmatprep.mubr.bf16.mxu0 0
        %573 = vmatmul.mubr.bf16.gmra.mxu0 %v283
        %v574 = vpop.f32.mrf.mxu0
        %v575 = vadd.f32 0.0, %v574
        %v576 = vpop.f32.mrf.mxu0
        %v577 = vadd.f32 0.0, %v576
        %v578 = vpop.f32.mrf.mxu0
        %v579 = vpop.f32.mrf.mxu0
        %580 = vdwg.mxu0
        %581 = vmatprep.subr.bf16.mxu0 0
        %582 = vmatpush1.bf16.xpose.msra.mxu0 %v499
        %583 = vmatprep.subr.bf16.mxu0 0
        %584 = vmatpush1.bf16.xpose.msra.mxu0 %v498
        %585 = vmatprep.subr.bf16.mxu0 0
        %586 = vmatpush1.bf16.xpose.msra.mxu0 %v497
        %587 = vmatprep.subr.bf16.mxu0 0
        %588 = vmatpush1.bf16.xpose.msra.mxu0 %v496
        %589 = vmatprep.subr.bf16.mxu0 0
        %590 = vmatpush1.bf16.xpose.msra.mxu0 %v495
        %591 = vmatprep.subr.bf16.mxu0 0
        %592 = vmatpush1.bf16.xpose.msra.mxu0 %v494
        %593 = vmatprep.subr.bf16.mxu0 0
        %594 = vmatpush1.bf16.xpose.msra.mxu0 %v493
        %595 = vmatprep.subr.bf16.mxu0 0
        %596 = vmatpush1.bf16.xpose.msra.mxu0 %v492
        %597 = vmatprep.subr.bf16.mxu0 0
        %598 = vmatpush2.bf16.xpose.msra.mxu0 %v507
        %599 = vmatprep.subr.bf16.mxu0 0
        %600 = vmatpush2.bf16.xpose.msra.mxu0 %v506
        %601 = vmatprep.subr.bf16.mxu0 0
        %602 = vmatpush2.bf16.xpose.msra.mxu0 %v505
        %603 = vmatprep.subr.bf16.mxu0 0
        %604 = vmatpush2.bf16.xpose.msra.mxu0 %v504
        %605 = vmatprep.subr.bf16.mxu0 0
        %606 = vmatpush2.bf16.xpose.msra.mxu0 %v503
        %607 = vmatprep.subr.bf16.mxu0 0
        %608 = vmatpush2.bf16.xpose.msra.mxu0 %v502
        %609 = vmatprep.subr.bf16.mxu0 0
        %610 = vmatpush2.bf16.xpose.msra.mxu0 %v501
        %611 = vmatprep.subr.bf16.mxu0 0
        %612 = vmatpush2.bf16.xpose.msra.mxu0 %v500
        %613 = vmatprep.mubr.bf16.mxu0 0
        %614 = vmatmul.mubr.bf16.gmra.mxu0 %v283
        %v615 = vpop.f32.mrf.mxu0
        %v616 = vadd.f32 0.0, %v615
        %v617 = vpop.f32.mrf.mxu0
        %v618 = vadd.f32 0.0, %v617
        %v619 = vpop.f32.mrf.mxu0
        %v620 = vpop.f32.mrf.mxu0
        %621 = vdwg.mxu0
        %v622 = vld [vmem:[%s270] sm:$0xf]
        %v623 = vld [vmem:[%s3] sm:$0xff]
        %v624 = vlaneseq
        %v625 = vshrl.u32 %v624, 7
        %v626 = vsub.s32 0, %v625
        %v627 = vrot.slane %v622, %v626
        %v628 = vlaneseq
        %v629 = vshrl.u32 %v628, 7
        %v630 = vsub.s32 1, %v629
        %v631 = vrot.slane %v622, %v630
        %v632 = vlaneseq
        %v633 = vshrl.u32 %v632, 7
        %v634 = vsub.s32 2, %v633
        %v635 = vrot.slane %v622, %v634
        %v636 = vlaneseq
        %v637 = vshrl.u32 %v636, 7
        %v638 = vsub.s32 3, %v637
        %v639 = vrot.slane %v622, %v638
        %640 = vset.pattern.permute.xlu0 0
        %641 = vperm.xlu0 %640, %v623
        %v642 = vpop.permute.xlu0 %641
        %vm643 = vcmp.eq.s32.totalorder %v627, %v642
        %vm644 = vcmp.eq.s32.totalorder %v631, %v642
        %vm645 = vcmp.eq.s32.totalorder %v635, %v642
        %vm646 = vcmp.eq.s32.totalorder %v639, %v642
        %v647 = vsel %vm643, %v575, 0.0
        %v648 = vsel %vm644, %v577, 0.0
        %v649 = vsel %vm645, %v616, 0.0
        %v650 = vsel %vm646, %v618, 0.0
        %v651 = vld [vmem:[%s275] sm:$0xf]
        %v652 = vlaneseq
        %v653 = vshrl.u32 %v652, 7
        %v654 = vadd.s32 %v653, 8
        %v655 = vadd.s32 %v653, 16
        %v656 = vadd.s32 %v653, 24
        %v657 = vadd.s32 %v653, 32
        %v658 = vadd.s32 %v653, 40
        %v659 = vadd.s32 %v653, 48
        %v660 = vadd.s32 %v653, 56
        %v661 = vadd.s32 %v653, 64
        %v662 = vadd.s32 %v653, 72
        %v663 = vadd.s32 %v653, 80
        %v664 = vadd.s32 %v653, 88
        %v665 = vadd.s32 %v653, 96
        %v666 = vadd.s32 %v653, 104
        %v667 = vadd.s32 %v653, 112
        %v668 = vadd.s32 %v653, 120
        %s669 = smul.u32 %s24, 128
        %v670 = vstv %s669
        %v671 = vsub.s32 %v651, %v670
        %v672 = vlaneseq
        %v673 = vshrl.u32 %v672, 7
        %v674 = vsub.s32 0, %v673
        %v675 = vrot.slane %v671, %v674
        %v676 = vlaneseq
        %v677 = vshrl.u32 %v676, 7
        %v678 = vsub.s32 1, %v677
        %v679 = vrot.slane %v671, %v678
        %v680 = vlaneseq
        %v681 = vshrl.u32 %v680, 7
        %v682 = vsub.s32 2, %v681
        %v683 = vrot.slane %v671, %v682
        %v684 = vlaneseq
        %v685 = vshrl.u32 %v684, 7
        %v686 = vsub.s32 3, %v685
        %v687 = vrot.slane %v671, %v686
        %vm688 = vcmp.eq.s32.totalorder %v653, %v675
        %vm689 = vcmp.eq.s32.totalorder %v653, %v679
        %vm690 = vcmp.eq.s32.totalorder %v653, %v683
        %vm691 = vcmp.eq.s32.totalorder %v653, %v687
        %vm692 = vcmp.eq.s32.totalorder %v654, %v675
        %vm693 = vcmp.eq.s32.totalorder %v654, %v679
        %vm694 = vcmp.eq.s32.totalorder %v654, %v683
        %vm695 = vcmp.eq.s32.totalorder %v654, %v687
        %vm696 = vcmp.eq.s32.totalorder %v655, %v675
        %vm697 = vcmp.eq.s32.totalorder %v655, %v679
        %vm698 = vcmp.eq.s32.totalorder %v655, %v683
        %vm699 = vcmp.eq.s32.totalorder %v655, %v687
        %vm700 = vcmp.eq.s32.totalorder %v656, %v675
        %vm701 = vcmp.eq.s32.totalorder %v656, %v679
        %vm702 = vcmp.eq.s32.totalorder %v656, %v683
        %vm703 = vcmp.eq.s32.totalorder %v656, %v687
        %vm704 = vcmp.eq.s32.totalorder %v657, %v675
        %vm705 = vcmp.eq.s32.totalorder %v657, %v679
        %vm706 = vcmp.eq.s32.totalorder %v657, %v683
        %vm707 = vcmp.eq.s32.totalorder %v657, %v687
        %vm708 = vcmp.eq.s32.totalorder %v658, %v675
        %vm709 = vcmp.eq.s32.totalorder %v658, %v679
        %vm710 = vcmp.eq.s32.totalorder %v658, %v683
        %vm711 = vcmp.eq.s32.totalorder %v658, %v687
        %vm712 = vcmp.eq.s32.totalorder %v659, %v675
        %vm713 = vcmp.eq.s32.totalorder %v659, %v679
        %vm714 = vcmp.eq.s32.totalorder %v659, %v683
        %vm715 = vcmp.eq.s32.totalorder %v659, %v687
        %vm716 = vcmp.eq.s32.totalorder %v660, %v675
        %vm717 = vcmp.eq.s32.totalorder %v660, %v679
        %vm718 = vcmp.eq.s32.totalorder %v660, %v683
        %vm719 = vcmp.eq.s32.totalorder %v660, %v687
        %vm720 = vcmp.eq.s32.totalorder %v661, %v675
        %vm721 = vcmp.eq.s32.totalorder %v661, %v679
        %vm722 = vcmp.eq.s32.totalorder %v661, %v683
        %vm723 = vcmp.eq.s32.totalorder %v661, %v687
        %vm724 = vcmp.eq.s32.totalorder %v662, %v675
        %vm725 = vcmp.eq.s32.totalorder %v662, %v679
        %vm726 = vcmp.eq.s32.totalorder %v662, %v683
        %vm727 = vcmp.eq.s32.totalorder %v662, %v687
        %vm728 = vcmp.eq.s32.totalorder %v663, %v675
        %vm729 = vcmp.eq.s32.totalorder %v663, %v679
        %vm730 = vcmp.eq.s32.totalorder %v663, %v683
        %vm731 = vcmp.eq.s32.totalorder %v663, %v687
        %vm732 = vcmp.eq.s32.totalorder %v664, %v675
        %vm733 = vcmp.eq.s32.totalorder %v664, %v679
        %vm734 = vcmp.eq.s32.totalorder %v664, %v683
        %vm735 = vcmp.eq.s32.totalorder %v664, %v687
        %vm736 = vcmp.eq.s32.totalorder %v665, %v675
        %vm737 = vcmp.eq.s32.totalorder %v665, %v679
        %vm738 = vcmp.eq.s32.totalorder %v665, %v683
        %vm739 = vcmp.eq.s32.totalorder %v665, %v687
        %vm740 = vcmp.eq.s32.totalorder %v666, %v675
        %vm741 = vcmp.eq.s32.totalorder %v666, %v679
        %vm742 = vcmp.eq.s32.totalorder %v666, %v683
        %vm743 = vcmp.eq.s32.totalorder %v666, %v687
        %vm744 = vcmp.eq.s32.totalorder %v667, %v675
        %vm745 = vcmp.eq.s32.totalorder %v667, %v679
        %vm746 = vcmp.eq.s32.totalorder %v667, %v683
        %vm747 = vcmp.eq.s32.totalorder %v667, %v687
        %vm748 = vcmp.eq.s32.totalorder %v668, %v675
        %vm749 = vcmp.eq.s32.totalorder %v668, %v679
        %vm750 = vcmp.eq.s32.totalorder %v668, %v683
        %vm751 = vcmp.eq.s32.totalorder %v668, %v687
        %v752 = vsel %vm688, 1, 0
        %v753 = vsel %vm689, 1, 0
        %v754 = vsel %vm690, 1, 0
        %v755 = vsel %vm691, 1, 0
        %v756 = vsel %vm692, 1, 0
        %v757 = vsel %vm693, 1, 0
        %v758 = vsel %vm694, 1, 0
        %v759 = vsel %vm695, 1, 0
        %v760 = vsel %vm696, 1, 0
        %v761 = vsel %vm697, 1, 0
        %v762 = vsel %vm698, 1, 0
        %v763 = vsel %vm699, 1, 0
        %v764 = vsel %vm700, 1, 0
        %v765 = vsel %vm701, 1, 0
        %v766 = vsel %vm702, 1, 0
        %v767 = vsel %vm703, 1, 0
        %v768 = vsel %vm704, 1, 0
        %v769 = vsel %vm705, 1, 0
        %v770 = vsel %vm706, 1, 0
        %v771 = vsel %vm707, 1, 0
        %v772 = vsel %vm708, 1, 0
        %v773 = vsel %vm709, 1, 0
        %v774 = vsel %vm710, 1, 0
        %v775 = vsel %vm711, 1, 0
        %v776 = vsel %vm712, 1, 0
        %v777 = vsel %vm713, 1, 0
        %v778 = vsel %vm714, 1, 0
        %v779 = vsel %vm715, 1, 0
        %v780 = vsel %vm716, 1, 0
        %v781 = vsel %vm717, 1, 0
        %v782 = vsel %vm718, 1, 0
        %v783 = vsel %vm719, 1, 0
        %v784 = vsel %vm720, 1, 0
        %v785 = vsel %vm721, 1, 0
        %v786 = vsel %vm722, 1, 0
        %v787 = vsel %vm723, 1, 0
        %v788 = vsel %vm724, 1, 0
        %v789 = vsel %vm725, 1, 0
        %v790 = vsel %vm726, 1, 0
        %v791 = vsel %vm727, 1, 0
        %v792 = vsel %vm728, 1, 0
        %v793 = vsel %vm729, 1, 0
        %v794 = vsel %vm730, 1, 0
        %v795 = vsel %vm731, 1, 0
        %v796 = vsel %vm732, 1, 0
        %v797 = vsel %vm733, 1, 0
        %v798 = vsel %vm734, 1, 0
        %v799 = vsel %vm735, 1, 0
        %v800 = vsel %vm736, 1, 0
        %v801 = vsel %vm737, 1, 0
        %v802 = vsel %vm738, 1, 0
        %v803 = vsel %vm739, 1, 0
        %v804 = vsel %vm740, 1, 0
        %v805 = vsel %vm741, 1, 0
        %v806 = vsel %vm742, 1, 0
        %v807 = vsel %vm743, 1, 0
        %v808 = vsel %vm744, 1, 0
        %v809 = vsel %vm745, 1, 0
        %v810 = vsel %vm746, 1, 0
        %v811 = vsel %vm747, 1, 0
        %v812 = vsel %vm748, 1, 0
        %v813 = vsel %vm749, 1, 0
        %v814 = vsel %vm750, 1, 0
        %v815 = vsel %vm751, 1, 0
        %v816 = vcvt.s32.f32 %v752
        %v817 = vcvt.s32.f32 %v753
        %v818 = vcvt.s32.f32 %v754
        %v819 = vcvt.s32.f32 %v755
        %v820 = vcvt.s32.f32 %v756
        %v821 = vcvt.s32.f32 %v757
        %v822 = vcvt.s32.f32 %v758
        %v823 = vcvt.s32.f32 %v759
        %v824 = vcvt.s32.f32 %v760
        %v825 = vcvt.s32.f32 %v761
        %v826 = vcvt.s32.f32 %v762
        %v827 = vcvt.s32.f32 %v763
        %v828 = vcvt.s32.f32 %v764
        %v829 = vcvt.s32.f32 %v765
        %v830 = vcvt.s32.f32 %v766
        %v831 = vcvt.s32.f32 %v767
        %v832 = vcvt.s32.f32 %v768
        %v833 = vcvt.s32.f32 %v769
        %v834 = vcvt.s32.f32 %v770
        %v835 = vcvt.s32.f32 %v771
        %v836 = vcvt.s32.f32 %v772
        %v837 = vcvt.s32.f32 %v773
        %v838 = vcvt.s32.f32 %v774
        %v839 = vcvt.s32.f32 %v775
        %v840 = vcvt.s32.f32 %v776
        %v841 = vcvt.s32.f32 %v777
        %v842 = vcvt.s32.f32 %v778
        %v843 = vcvt.s32.f32 %v779
        %v844 = vcvt.s32.f32 %v780
        %v845 = vcvt.s32.f32 %v781
        %v846 = vcvt.s32.f32 %v782
        %v847 = vcvt.s32.f32 %v783
        %v848 = vcvt.s32.f32 %v784
        %v849 = vcvt.s32.f32 %v785
        %v850 = vcvt.s32.f32 %v786
        %v851 = vcvt.s32.f32 %v787
        %v852 = vcvt.s32.f32 %v788
        %v853 = vcvt.s32.f32 %v789
        %v854 = vcvt.s32.f32 %v790
        %v855 = vcvt.s32.f32 %v791
        %v856 = vcvt.s32.f32 %v792
        %v857 = vcvt.s32.f32 %v793
        %v858 = vcvt.s32.f32 %v794
        %v859 = vcvt.s32.f32 %v795
        %v860 = vcvt.s32.f32 %v796
        %v861 = vcvt.s32.f32 %v797
        %v862 = vcvt.s32.f32 %v798
        %v863 = vcvt.s32.f32 %v799
        %v864 = vcvt.s32.f32 %v800
        %v865 = vcvt.s32.f32 %v801
        %v866 = vcvt.s32.f32 %v802
        %v867 = vcvt.s32.f32 %v803
        %v868 = vcvt.s32.f32 %v804
        %v869 = vcvt.s32.f32 %v805
        %v870 = vcvt.s32.f32 %v806
        %v871 = vcvt.s32.f32 %v807
        %v872 = vcvt.s32.f32 %v808
        %v873 = vcvt.s32.f32 %v809
        %v874 = vcvt.s32.f32 %v810
        %v875 = vcvt.s32.f32 %v811
        %v876 = vcvt.s32.f32 %v812
        %v877 = vcvt.s32.f32 %v813
        %v878 = vcvt.s32.f32 %v814
        %v879 = vcvt.s32.f32 %v815
        %v880 = vld [vmem:[%s265] sm:$0xff]
        %881 = vmatprep.subr.mxu0 %v877
        %882 = vmatpush1.xpose.msra.mxu0 %v876
        %883 = vmatprep.subr.mxu0 %v873
        %884 = vmatpush1.xpose.msra.mxu0 %v872
        %885 = vmatprep.subr.mxu0 %v869
        %886 = vmatpush1.xpose.msra.mxu0 %v868
        %887 = vmatprep.subr.mxu0 %v865
        %888 = vmatpush1.xpose.msra.mxu0 %v864
        %889 = vmatprep.subr.mxu0 %v861
        %890 = vmatpush1.xpose.msra.mxu0 %v860
        %891 = vmatprep.subr.mxu0 %v857
        %892 = vmatpush1.xpose.msra.mxu0 %v856
        %893 = vmatprep.subr.mxu0 %v853
        %894 = vmatpush1.xpose.msra.mxu0 %v852
        %895 = vmatprep.subr.mxu0 %v849
        %896 = vmatpush1.xpose.msra.mxu0 %v848
        %897 = vmatprep.subr.mxu0 %v845
        %898 = vmatpush1.xpose.msra.mxu0 %v844
        %899 = vmatprep.subr.mxu0 %v841
        %900 = vmatpush1.xpose.msra.mxu0 %v840
        %901 = vmatprep.subr.mxu0 %v837
        %902 = vmatpush1.xpose.msra.mxu0 %v836
        %903 = vmatprep.subr.mxu0 %v833
        %904 = vmatpush1.xpose.msra.mxu0 %v832
        %905 = vmatprep.subr.mxu0 %v829
        %906 = vmatpush1.xpose.msra.mxu0 %v828
        %907 = vmatprep.subr.mxu0 %v825
        %908 = vmatpush1.xpose.msra.mxu0 %v824
        %909 = vmatprep.subr.mxu0 %v821
        %910 = vmatpush1.xpose.msra.mxu0 %v820
        %911 = vmatprep.subr.mxu0 %v817
        %912 = vmatpush1.xpose.msra.mxu0 %v816
        %913 = vmatprep.subr.mxu0 0.0
        %914 = vmatpush2.xpose.msra.mxu0 0.0
        %915 = vmatprep.subr.mxu0 0.0
        %916 = vmatpush2.xpose.msra.mxu0 0.0
        %917 = vmatprep.subr.mxu0 0.0
        %918 = vmatpush2.xpose.msra.mxu0 0.0
        %919 = vmatprep.subr.mxu0 0.0
        %920 = vmatpush2.xpose.msra.mxu0 0.0
        %921 = vmatprep.subr.mxu0 0.0
        %922 = vmatpush2.xpose.msra.mxu0 0.0
        %923 = vmatprep.subr.mxu0 0.0
        %924 = vmatpush2.xpose.msra.mxu0 0.0
        %925 = vmatprep.subr.mxu0 0.0
        %926 = vmatpush2.xpose.msra.mxu0 0.0
        %927 = vmatprep.subr.mxu0 0.0
        %928 = vmatpush2.xpose.msra.mxu0 0.0
        %929 = vmatprep.subr.mxu0 0.0
        %930 = vmatpush2.xpose.msra.mxu0 0.0
        %931 = vmatprep.subr.mxu0 0.0
        %932 = vmatpush2.xpose.msra.mxu0 0.0
        %933 = vmatprep.subr.mxu0 0.0
        %934 = vmatpush2.xpose.msra.mxu0 0.0
        %935 = vmatprep.subr.mxu0 0.0
        %936 = vmatpush2.xpose.msra.mxu0 0.0
        %937 = vmatprep.subr.mxu0 0.0
        %938 = vmatpush2.xpose.msra.mxu0 0.0
        %939 = vmatprep.subr.mxu0 0.0
        %940 = vmatpush2.xpose.msra.mxu0 0.0
        %941 = vmatprep.subr.mxu0 0.0
        %942 = vmatpush2.xpose.msra.mxu0 0.0
        %943 = vmatprep.subr.mxu0 0.0
        %944 = vmatpush2.xpose.msra.mxu0 0.0
        %945 = vmatprep.mubr.f32.mxu0 %v648
        %946 = vmatmul.mubr.f32.gmra.mxu0 %v647
        %v947 = vpop.f32.mrf.mxu0
        %v948 = vadd.f32 0.0, %v947
        %v949 = vpop.f32.mrf.mxu0
        %950 = vdwg.mxu0
        %951 = vmatprep.subr.mxu0 %v879
        %952 = vmatpush1.xpose.msra.mxu0 %v878
        %953 = vmatprep.subr.mxu0 %v875
        %954 = vmatpush1.xpose.msra.mxu0 %v874
        %955 = vmatprep.subr.mxu0 %v871
        %956 = vmatpush1.xpose.msra.mxu0 %v870
        %957 = vmatprep.subr.mxu0 %v867
        %958 = vmatpush1.xpose.msra.mxu0 %v866
        %959 = vmatprep.subr.mxu0 %v863
        %960 = vmatpush1.xpose.msra.mxu0 %v862
        %961 = vmatprep.subr.mxu0 %v859
        %962 = vmatpush1.xpose.msra.mxu0 %v858
        %963 = vmatprep.subr.mxu0 %v855
        %964 = vmatpush1.xpose.msra.mxu0 %v854
        %965 = vmatprep.subr.mxu0 %v851
        %966 = vmatpush1.xpose.msra.mxu0 %v850
        %967 = vmatprep.subr.mxu0 %v847
        %968 = vmatpush1.xpose.msra.mxu0 %v846
        %969 = vmatprep.subr.mxu0 %v843
        %970 = vmatpush1.xpose.msra.mxu0 %v842
        %971 = vmatprep.subr.mxu0 %v839
        %972 = vmatpush1.xpose.msra.mxu0 %v838
        %973 = vmatprep.subr.mxu0 %v835
        %974 = vmatpush1.xpose.msra.mxu0 %v834
        %975 = vmatprep.subr.mxu0 %v831
        %976 = vmatpush1.xpose.msra.mxu0 %v830
        %977 = vmatprep.subr.mxu0 %v827
        %978 = vmatpush1.xpose.msra.mxu0 %v826
        %979 = vmatprep.subr.mxu0 %v823
        %980 = vmatpush1.xpose.msra.mxu0 %v822
        %981 = vmatprep.subr.mxu0 %v819
        %982 = vmatpush1.xpose.msra.mxu0 %v818
        %983 = vmatprep.subr.mxu0 0.0
        %984 = vmatpush2.xpose.msra.mxu0 0.0
        %985 = vmatprep.subr.mxu0 0.0
        %986 = vmatpush2.xpose.msra.mxu0 0.0
        %987 = vmatprep.subr.mxu0 0.0
        %988 = vmatpush2.xpose.msra.mxu0 0.0
        %989 = vmatprep.subr.mxu0 0.0
        %990 = vmatpush2.xpose.msra.mxu0 0.0
        %991 = vmatprep.subr.mxu0 0.0
        %992 = vmatpush2.xpose.msra.mxu0 0.0
        %993 = vmatprep.subr.mxu0 0.0
        %994 = vmatpush2.xpose.msra.mxu0 0.0
        %995 = vmatprep.subr.mxu0 0.0
        %996 = vmatpush2.xpose.msra.mxu0 0.0
        %997 = vmatprep.subr.mxu0 0.0
        %998 = vmatpush2.xpose.msra.mxu0 0.0
        %999 = vmatprep.subr.mxu0 0.0
        %1000 = vmatpush2.xpose.msra.mxu0 0.0
        %1001 = vmatprep.subr.mxu0 0.0
        %1002 = vmatpush2.xpose.msra.mxu0 0.0
        %1003 = vmatprep.subr.mxu0 0.0
        %1004 = vmatpush2.xpose.msra.mxu0 0.0
        %1005 = vmatprep.subr.mxu0 0.0
        %1006 = vmatpush2.xpose.msra.mxu0 0.0
        %1007 = vmatprep.subr.mxu0 0.0
        %1008 = vmatpush2.xpose.msra.mxu0 0.0
        %1009 = vmatprep.subr.mxu0 0.0
        %1010 = vmatpush2.xpose.msra.mxu0 0.0
        %1011 = vmatprep.subr.mxu0 0.0
        %1012 = vmatpush2.xpose.msra.mxu0 0.0
        %1013 = vmatprep.subr.mxu0 0.0
        %1014 = vmatpush2.xpose.msra.mxu0 0.0
        %1015 = vmatprep.mubr.f32.mxu0 %v650
        %1016 = vmatmul.mubr.f32.gmra.mxu0 %v649
        %v1017 = vpop.f32.mrf.mxu0
        %v1018 = vadd.f32 %v948, %v1017
        %v1019 = vpop.f32.mrf.mxu0
        %1020 = vdwg.mxu0
        %v1021 = vadd.f32 %v880, %v1018
        %1022 = vst [vmem:[%s265] sm:$0xff] %v1021
        %s1023 = sand.u32 %s160, 1
        %s1024 = scalar_lea.sflag [#allocation4], %s1023
        %s1025 = sand.u32 %s160, 1
        %s1026 = smul.addr %s1025, 8
        %s1027 = scalar_lea.vmem [#allocation5], %s1026
        // Predicated region
        $region49: #{tpu_custom_call.1} parent=39 // pred_check
          %p1028 = pneg %p170
        $region50: #{tpu_custom_call.1} parent=39 // pred_check_branch
          %1030 = sbr.rel (%p1028) target = $region52
        $region51: #{tpu_custom_call.1} parent=39 // pred_region
          %s1032 = ssub.s32 128, 128
          %1033 = vsyncadd %s1024, %s1032
          %s1034 = smul.addr %s24, 128
          %s1035 = scalar_lea.hbm %s5, %s1034
          %s1037 = sshll.u32 %s1027, 4
          %s1038 = int_to_ptr.vmem [resolvable:$true] %s1037
          %1040 = dma.vmem_to_hbm [thread:$0]  %s1038, 128, %s1035, %s1024
        $region52: #{tpu_custom_call.1} parent=39 // pred_fallthru
          _
      $region40: #{tpu_custom_call.1} parent=5 // pred_fallthru
        _
      %p1041 = scmp.le.s32.totalorder 2, %s15
      // Predicated region
      $region53: #{tpu_custom_call.1} parent=5 // pred_check
        %p1042 = pneg %p1041
      $region54: #{tpu_custom_call.1} parent=5 // pred_check_branch
        %1044 = sbr.rel (%p1042) target = $region56
      $region55: #{tpu_custom_call.1} parent=5 // pred_region
        %s1045 = ssub.s32 %s15, 2
        // Predicated region
        $region57: #{tpu_custom_call.1} parent=55 // pred_check
          %p1046 = pneg %p176
        $region58: #{tpu_custom_call.1} parent=55 // pred_check_branch
          %1048 = sbr.rel (%p1046) target = $region60
        $region59: #{tpu_custom_call.1} parent=55 // pred_region
          %s1049 = sand.u32 %s161, 1
          %s1050 = scalar_lea.sflag [#allocation4], %s1049
          %s1051 = sand.u32 %s161, 1
          %s1052 = smul.addr %s1051, 8
          %s1053 = scalar_lea.vmem [#allocation5], %s1052
          %1054 = dma.done %s1050, 128
        $region60: #{tpu_custom_call.1} parent=55 // pred_fallthru
          _
      $region56: #{tpu_custom_call.1} parent=5 // pred_fallthru
        _
    $region6: #{tpu_custom_call.1} parent=1 // loop_footer
      %s19 = sadd.s32 1, %s15
    $region7: #{tpu_custom_call.1} parent=1 // loop_footer_branch
      %14 = sbr.rel target = $region3
    $region8: #{tpu_custom_call.1} parent=1 // loop_exit
      _
    %1055 = vsyncpa [#allocation3], 1
    %s1056 = scalar_lea.sflag [#allocation3], 1
    %1057 = vsyncpa %s1056, 1
    %1058 = vsyncpa [#allocation4], 1
    %s1059 = scalar_lea.sflag [#allocation4], 1
    %1060 = vsyncpa %s1059, 1

</llo_original>
